<compile_context>
chip_gen: v6e
topology: v6e:2x2x1
jax: 0.10.0
libtpu: 0.0.40
codegen_flags: <defaults>
</compile_context>

<pallas_src>
import functools

import numpy as np
import jax
import jax.numpy as jnp
from jax.experimental import pallas as pl
from jax.experimental.pallas import tpu as pltpu


def _basenet_kernel(x0_ref, rhs_ref, bias_ref, xs_ref, gs_ref, fs_ref,
                    *, k_iter, d):
    """Whole BaseNet forward in one invocation.

    One merged MXU dot per recorded step:
      z = x_k @ [T | A^T | Q] + [c | -bq | -cq]
        lanes 0:d    -> x_{k+1}
        lanes d:2d   -> r_k  = A x_k - b      (for f_k = 0.5 ||r_k||^2)
        lanes 2d:3d  -> gx_k = A^T (A x_k - b)
    """
    rhs = rhs_ref[...]        # [D, 3D]
    bias = bias_ref[...]      # [1, 3D]

    xk = x0_ref[...]          # [B, D] carried iterate lives in vregs
    # Static Python loop (K is small and fixed at trace time): fully unrolled,
    # no grid-step overhead; chain = (K+1) serial dots.
    for k in range(k_iter + 1):
        z = jnp.dot(xk, rhs, preferred_element_type=jnp.float32) + bias  # [B, 3D]
        x_next = z[:, 0:d]
        r = z[:, d:2 * d]
        gx = z[:, 2 * d:3 * d]
        fx = 0.5 * jnp.sum(r * r, axis=-1, keepdims=True)                # [B, 1]

        # _expand_list: record x_k, gx, fx (nfcn = 1 => sum over fcn dim is fx).
        xs_ref[k] = xk
        gs_ref[k] = gx
        fs_ref[k] = fx

        xk = x_next   # unused on the final iteration


def basenet_forward(x0, A, bq, W1, b1, W2, b2, k_iter):
    B, D = x0.shape
    K1 = k_iter + 1
    hp = jax.lax.Precision.HIGHEST

    AT = A.T                                                        # [D, D]
    # Gradient fusion:  gx = x @ (A^T A) - bq @ A
    Q = jnp.dot(AT, A, precision=hp)                                # [D, D]
    cq = jnp.dot(bq.reshape(1, D), A, precision=hp)                 # [1, D]

    # Fuse the two affine layers (no nonlinearity in between => exact):
    #   delta = (gx @ W1^T + b1) @ W2^T + b2 = gx @ Wc + bc
    Wc = jnp.dot(W1.T, W2.T, precision=hp)                          # [D, D]
    bc = (jnp.dot(b1.reshape(1, -1), W2.T, precision=hp)
          + b2.reshape(1, D))                                       # [1, D]

    # Recurrence fusion:  x_{k+1} = x_k + gx @ Wc + bc = x_k @ T + c
    T = jnp.eye(D, dtype=x0.dtype) + jnp.dot(Q, Wc, precision=hp)   # [D, D]
    c = bc - jnp.dot(cq, Wc, precision=hp)                          # [1, D]

    # Single merged RHS / bias for the per-step dot.
    rhs = jnp.concatenate([T, AT, Q], axis=1)                       # [D, 3D]
    bias = jnp.concatenate([c, -bq.reshape(1, D), -cq], axis=1)     # [1, 3D]

    vmem = pl.BlockSpec(memory_space=pltpu.MemorySpace.VMEM)

    xs, gs, fs = pl.pallas_call(
        functools.partial(_basenet_kernel, k_iter=k_iter, d=D),
        out_shape=(
            jax.ShapeDtypeStruct((K1, B, D), jnp.float32),   # x_k per step
            jax.ShapeDtypeStruct((K1, B, D), jnp.float32),   # gx per step
            jax.ShapeDtypeStruct((K1, B, 1), jnp.float32),   # fx per step
        ),
        in_specs=[vmem] * 3,          # full arrays resident in VMEM, no pipelining
        out_specs=(vmem, vmem, vmem),
    )(x0, rhs, bias)

    fk_out = fs.reshape(K1, B)        # contiguous squeeze; metadata-only in XLA
    return xs, fk_out, gs


def basenet_reference(x0, A, bq, W1, b1, W2, b2, k_iter):
    """Plain-JAX reference matching BaseNet.forward (affine branch)."""
    hp = jax.lax.Precision.HIGHEST

    def evalf(x):
        r = jnp.dot(x, A.T, precision=hp) - bq
        return 0.5 * jnp.sum(r * r, axis=-1), jnp.dot(r, A, precision=hp)

    xk = x0
    fx, gx = evalf(xk)
    xs, fs, gs = [xk], [fx], [gx]
    for _ in range(k_iter):
        h = jnp.dot(gx, W1.T, precision=hp) + b1
        delta = jnp.dot(h, W2.T, precision=hp) + b2
        xk = xk + delta
        fx, gx = evalf(xk)
        xs.append(xk); fs.append(fx); gs.append(gx)
    return jnp.stack(xs), jnp.stack(fs), jnp.stack(gs)


if __name__ == "__main__":
    B, D, K = 8, 16, 3          # batch (fills 8 sublanes), dimOut, k_iter
    FAC = 4                     # fac_hidden in BaseNet
    H = FAC * D                 # hidden_sz of FuseLayerAffine

    key = jax.random.PRNGKey(0)
    kx, ka, kb, kw = jax.random.split(key, 4)

    # inputs / synthetic quadratic oracle parameters
    x0 = jax.random.normal(kx, (B, D), jnp.float32)
    A = 0.3 * jax.random.normal(ka, (D, D), jnp.float32)
    bq = jax.random.normal(kb, (D,), jnp.float32)

    # FuseLayerAffine.init_weights: kron(ones(H/D,1), eye(D)) + N(0, 0.01), bias 0
    W1 = (jnp.kron(jnp.ones((FAC, 1)), jnp.eye(D))
          + 0.01 * jax.random.normal(kw, (H, D))).astype(jnp.float32)
    b1 = jnp.zeros((H,), jnp.float32)

    # ScaleLayerAffine.init_scale_weigths: kron(eye(D), ones(1, H/D)/(H/D)), bias 0
    W2 = jnp.kron(jnp.eye(D), jnp.ones((1, FAC)) / FAC).astype(jnp.float32)
    b2 = jnp.zeros((D,), jnp.float32)

    xk_out, fk_out, gk_out = basenet_forward(x0, A, bq, W1, b1, W2, b2, K)
    jax.block_until_ready((xk_out, fk_out, gk_out))

    xr, fr, gr = basenet_reference(x0, A, bq, W1, b1, W2, b2, K)
    np.testing.assert_allclose(np.asarray(xk_out), np.asarray(xr), rtol=1e-2, atol=1e-2)
    np.testing.assert_allclose(np.asarray(fk_out), np.asarray(fr), rtol=1e-2, atol=1e-2)
    np.testing.assert_allclose(np.asarray(gk_out), np.asarray(gr), rtol=1e-2, atol=1e-2)

    print("KERNEL_OK")
</pallas_src>

<mosaic_0001>
module attributes {stable_mosaic.version = 11 : i64} {
  func.func @_basenet_kernel(%arg0: memref<8x16xf32, #tpu.memory_space<vmem>>, %arg1: memref<16x48xf32, #tpu.memory_space<vmem>>, %arg2: memref<1x48xf32, #tpu.memory_space<vmem>>, %arg3: memref<4x8x16xf32, #tpu.memory_space<vmem>>, %arg4: memref<4x8x16xf32, #tpu.memory_space<vmem>>, %arg5: memref<4x8x1xf32, #tpu.memory_space<vmem>>) attributes {dimension_semantics = [], scalar_prefetch = 0 : i64, scratch_operands = 0 : i64, tpu.core_type = #tpu.core_type<tc>} {
    %c0 = arith.constant 0 : index
    %c0_0 = arith.constant 0 : index
    %0 = vector.load %arg1[%c0, %c0_0] : memref<16x48xf32, #tpu.memory_space<vmem>>, vector<16x48xf32>
    %c0_1 = arith.constant 0 : index
    %c0_2 = arith.constant 0 : index
    %1 = vector.load %arg2[%c0_1, %c0_2] : memref<1x48xf32, #tpu.memory_space<vmem>>, vector<1x48xf32>
    %c0_3 = arith.constant 0 : index
    %c0_4 = arith.constant 0 : index
    %2 = vector.load %arg0[%c0_3, %c0_4] : memref<8x16xf32, #tpu.memory_space<vmem>>, vector<8x16xf32>
    %cst = arith.constant dense<0.000000e+00> : vector<8x48xf32>
    %3 = tpu.matmul %2, %0, %cst {dimension_numbers = #tpu.dot_dimension_numbers<[1], [0], [0], [1], [0, 0, 1, 1], [], []>} : vector<8x16xf32>, vector<16x48xf32>, vector<8x48xf32> -> vector<8x48xf32>
    %4 = vector.broadcast %1 : vector<1x48xf32> to vector<8x48xf32>
    %5 = arith.addf %3, %4 : vector<8x48xf32>
    %6 = vector.extract_strided_slice %5 {offsets = [0, 0], sizes = [8, 16], strides = [1, 1]} : vector<8x48xf32> to vector<8x16xf32>
    %7 = vector.extract_strided_slice %5 {offsets = [0, 16], sizes = [8, 16], strides = [1, 1]} : vector<8x48xf32> to vector<8x16xf32>
    %8 = vector.extract_strided_slice %5 {offsets = [0, 32], sizes = [8, 16], strides = [1, 1]} : vector<8x48xf32> to vector<8x16xf32>
    %9 = arith.mulf %7, %7 : vector<8x16xf32>
    %cst_5 = arith.constant dense<0.000000e+00> : vector<8xf32>
    %10 = vector.multi_reduction <add>, %9, %cst_5 [1] : vector<8x16xf32> to vector<8xf32>
    %11 = vector.shape_cast %10 : vector<8xf32> to vector<8x1xf32>
    %cst_6 = arith.constant 5.000000e-01 : f32
    %12 = vector.broadcast %cst_6 : f32 to vector<8x1xf32>
    %13 = arith.mulf %12, %11 : vector<8x1xf32>
    %c0_7 = arith.constant 0 : index
    %c0_8 = arith.constant 0 : index
    %c0_9 = arith.constant 0 : index
    %14 = vector.load %arg3[%c0_7, %c0_8, %c0_9] : memref<4x8x16xf32, #tpu.memory_space<vmem>>, vector<1x8x16xf32>
    %15 = vector.shape_cast %14 : vector<1x8x16xf32> to vector<8x16xf32>
    %16 = vector.shape_cast %2 : vector<8x16xf32> to vector<1x8x16xf32>
    tpu.vector_store %arg3[%c0_7, %c0_8, %c0_9], %16 {strides = array<i32>} : memref<4x8x16xf32, #tpu.memory_space<vmem>>, vector<1x8x16xf32>,
    %c0_10 = arith.constant 0 : index
    %c0_11 = arith.constant 0 : index
    %c0_12 = arith.constant 0 : index
    %17 = vector.load %arg4[%c0_10, %c0_11, %c0_12] : memref<4x8x16xf32, #tpu.memory_space<vmem>>, vector<1x8x16xf32>
    %18 = vector.shape_cast %17 : vector<1x8x16xf32> to vector<8x16xf32>
    %19 = vector.shape_cast %8 : vector<8x16xf32> to vector<1x8x16xf32>
    tpu.vector_store %arg4[%c0_10, %c0_11, %c0_12], %19 {strides = array<i32>} : memref<4x8x16xf32, #tpu.memory_space<vmem>>, vector<1x8x16xf32>,
    %c0_13 = arith.constant 0 : index
    %c0_14 = arith.constant 0 : index
    %c0_15 = arith.constant 0 : index
    %20 = vector.load %arg5[%c0_13, %c0_14, %c0_15] : memref<4x8x1xf32, #tpu.memory_space<vmem>>, vector<1x8x1xf32>
    %21 = vector.shape_cast %20 : vector<1x8x1xf32> to vector<8x1xf32>
    %22 = vector.shape_cast %13 : vector<8x1xf32> to vector<1x8x1xf32>
    tpu.vector_store %arg5[%c0_13, %c0_14, %c0_15], %22 {strides = array<i32>} : memref<4x8x1xf32, #tpu.memory_space<vmem>>, vector<1x8x1xf32>,
    %cst_16 = arith.constant dense<0.000000e+00> : vector<8x48xf32>
    %23 = tpu.matmul %6, %0, %cst_16 {dimension_numbers = #tpu.dot_dimension_numbers<[1], [0], [0], [1], [0, 0, 1, 1], [], []>} : vector<8x16xf32>, vector<16x48xf32>, vector<8x48xf32> -> vector<8x48xf32>
    %24 = vector.broadcast %1 : vector<1x48xf32> to vector<8x48xf32>
    %25 = arith.addf %23, %24 : vector<8x48xf32>
    %26 = vector.extract_strided_slice %25 {offsets = [0, 0], sizes = [8, 16], strides = [1, 1]} : vector<8x48xf32> to vector<8x16xf32>
    %27 = vector.extract_strided_slice %25 {offsets = [0, 16], sizes = [8, 16], strides = [1, 1]} : vector<8x48xf32> to vector<8x16xf32>
    %28 = vector.extract_strided_slice %25 {offsets = [0, 32], sizes = [8, 16], strides = [1, 1]} : vector<8x48xf32> to vector<8x16xf32>
    %29 = arith.mulf %27, %27 : vector<8x16xf32>
    %cst_17 = arith.constant dense<0.000000e+00> : vector<8xf32>
    %30 = vector.multi_reduction <add>, %29, %cst_17 [1] : vector<8x16xf32> to vector<8xf32>
    %31 = vector.shape_cast %30 : vector<8xf32> to vector<8x1xf32>
    %cst_18 = arith.constant 5.000000e-01 : f32
    %32 = vector.broadcast %cst_18 : f32 to vector<8x1xf32>
    %33 = arith.mulf %32, %31 : vector<8x1xf32>
    %c1 = arith.constant 1 : index
    %c0_19 = arith.constant 0 : index
    %c0_20 = arith.constant 0 : index
    %34 = vector.load %arg3[%c1, %c0_19, %c0_20] : memref<4x8x16xf32, #tpu.memory_space<vmem>>, vector<1x8x16xf32>
    %35 = vector.shape_cast %34 : vector<1x8x16xf32> to vector<8x16xf32>
    %36 = vector.shape_cast %6 : vector<8x16xf32> to vector<1x8x16xf32>
    tpu.vector_store %arg3[%c1, %c0_19, %c0_20], %36 {strides = array<i32>} : memref<4x8x16xf32, #tpu.memory_space<vmem>>, vector<1x8x16xf32>,
    %c1_21 = arith.constant 1 : index
    %c0_22 = arith.constant 0 : index
    %c0_23 = arith.constant 0 : index
    %37 = vector.load %arg4[%c1_21, %c0_22, %c0_23] : memref<4x8x16xf32, #tpu.memory_space<vmem>>, vector<1x8x16xf32>
    %38 = vector.shape_cast %37 : vector<1x8x16xf32> to vector<8x16xf32>
    %39 = vector.shape_cast %28 : vector<8x16xf32> to vector<1x8x16xf32>
    tpu.vector_store %arg4[%c1_21, %c0_22, %c0_23], %39 {strides = array<i32>} : memref<4x8x16xf32, #tpu.memory_space<vmem>>, vector<1x8x16xf32>,
    %c1_24 = arith.constant 1 : index
    %c0_25 = arith.constant 0 : index
    %c0_26 = arith.constant 0 : index
    %40 = vector.load %arg5[%c1_24, %c0_25, %c0_26] : memref<4x8x1xf32, #tpu.memory_space<vmem>>, vector<1x8x1xf32>
    %41 = vector.shape_cast %40 : vector<1x8x1xf32> to vector<8x1xf32>
    %42 = vector.shape_cast %33 : vector<8x1xf32> to vector<1x8x1xf32>
    tpu.vector_store %arg5[%c1_24, %c0_25, %c0_26], %42 {strides = array<i32>} : memref<4x8x1xf32, #tpu.memory_space<vmem>>, vector<1x8x1xf32>,
    %cst_27 = arith.constant dense<0.000000e+00> : vector<8x48xf32>
    %43 = tpu.matmul %26, %0, %cst_27 {dimension_numbers = #tpu.dot_dimension_numbers<[1], [0], [0], [1], [0, 0, 1, 1], [], []>} : vector<8x16xf32>, vector<16x48xf32>, vector<8x48xf32> -> vector<8x48xf32>
    %44 = vector.broadcast %1 : vector<1x48xf32> to vector<8x48xf32>
    %45 = arith.addf %43, %44 : vector<8x48xf32>
    %46 = vector.extract_strided_slice %45 {offsets = [0, 0], sizes = [8, 16], strides = [1, 1]} : vector<8x48xf32> to vector<8x16xf32>
    %47 = vector.extract_strided_slice %45 {offsets = [0, 16], sizes = [8, 16], strides = [1, 1]} : vector<8x48xf32> to vector<8x16xf32>
    %48 = vector.extract_strided_slice %45 {offsets = [0, 32], sizes = [8, 16], strides = [1, 1]} : vector<8x48xf32> to vector<8x16xf32>
    %49 = arith.mulf %47, %47 : vector<8x16xf32>
    %cst_28 = arith.constant dense<0.000000e+00> : vector<8xf32>
    %50 = vector.multi_reduction <add>, %49, %cst_28 [1] : vector<8x16xf32> to vector<8xf32>
    %51 = vector.shape_cast %50 : vector<8xf32> to vector<8x1xf32>
    %cst_29 = arith.constant 5.000000e-01 : f32
    %52 = vector.broadcast %cst_29 : f32 to vector<8x1xf32>
    %53 = arith.mulf %52, %51 : vector<8x1xf32>
    %c2 = arith.constant 2 : index
    %c0_30 = arith.constant 0 : index
    %c0_31 = arith.constant 0 : index
    %54 = vector.load %arg3[%c2, %c0_30, %c0_31] : memref<4x8x16xf32, #tpu.memory_space<vmem>>, vector<1x8x16xf32>
    %55 = vector.shape_cast %54 : vector<1x8x16xf32> to vector<8x16xf32>
    %56 = vector.shape_cast %26 : vector<8x16xf32> to vector<1x8x16xf32>
    tpu.vector_store %arg3[%c2, %c0_30, %c0_31], %56 {strides = array<i32>} : memref<4x8x16xf32, #tpu.memory_space<vmem>>, vector<1x8x16xf32>,
    %c2_32 = arith.constant 2 : index
    %c0_33 = arith.constant 0 : index
    %c0_34 = arith.constant 0 : index
    %57 = vector.load %arg4[%c2_32, %c0_33, %c0_34] : memref<4x8x16xf32, #tpu.memory_space<vmem>>, vector<1x8x16xf32>
    %58 = vector.shape_cast %57 : vector<1x8x16xf32> to vector<8x16xf32>
    %59 = vector.shape_cast %48 : vector<8x16xf32> to vector<1x8x16xf32>
    tpu.vector_store %arg4[%c2_32, %c0_33, %c0_34], %59 {strides = array<i32>} : memref<4x8x16xf32, #tpu.memory_space<vmem>>, vector<1x8x16xf32>,
    %c2_35 = arith.constant 2 : index
    %c0_36 = arith.constant 0 : index
    %c0_37 = arith.constant 0 : index
    %60 = vector.load %arg5[%c2_35, %c0_36, %c0_37] : memref<4x8x1xf32, #tpu.memory_space<vmem>>, vector<1x8x1xf32>
    %61 = vector.shape_cast %60 : vector<1x8x1xf32> to vector<8x1xf32>
    %62 = vector.shape_cast %53 : vector<8x1xf32> to vector<1x8x1xf32>
    tpu.vector_store %arg5[%c2_35, %c0_36, %c0_37], %62 {strides = array<i32>} : memref<4x8x1xf32, #tpu.memory_space<vmem>>, vector<1x8x1xf32>,
    %cst_38 = arith.constant dense<0.000000e+00> : vector<8x48xf32>
    %63 = tpu.matmul %46, %0, %cst_38 {dimension_numbers = #tpu.dot_dimension_numbers<[1], [0], [0], [1], [0, 0, 1, 1], [], []>} : vector<8x16xf32>, vector<16x48xf32>, vector<8x48xf32> -> vector<8x48xf32>
    %64 = vector.broadcast %1 : vector<1x48xf32> to vector<8x48xf32>
    %65 = arith.addf %63, %64 : vector<8x48xf32>
    %66 = vector.extract_strided_slice %65 {offsets = [0, 16], sizes = [8, 16], strides = [1, 1]} : vector<8x48xf32> to vector<8x16xf32>
    %67 = vector.extract_strided_slice %65 {offsets = [0, 32], sizes = [8, 16], strides = [1, 1]} : vector<8x48xf32> to vector<8x16xf32>
    %68 = arith.mulf %66, %66 : vector<8x16xf32>
    %cst_39 = arith.constant dense<0.000000e+00> : vector<8xf32>
    %69 = vector.multi_reduction <add>, %68, %cst_39 [1] : vector<8x16xf32> to vector<8xf32>
    %70 = vector.shape_cast %69 : vector<8xf32> to vector<8x1xf32>
    %cst_40 = arith.constant 5.000000e-01 : f32
    %71 = vector.broadcast %cst_40 : f32 to vector<8x1xf32>
    %72 = arith.mulf %71, %70 : vector<8x1xf32>
    %c3 = arith.constant 3 : index
    %c0_41 = arith.constant 0 : index
    %c0_42 = arith.constant 0 : index
    %73 = vector.load %arg3[%c3, %c0_41, %c0_42] : memref<4x8x16xf32, #tpu.memory_space<vmem>>, vector<1x8x16xf32>
    %74 = vector.shape_cast %73 : vector<1x8x16xf32> to vector<8x16xf32>
    %75 = vector.shape_cast %46 : vector<8x16xf32> to vector<1x8x16xf32>
    tpu.vector_store %arg3[%c3, %c0_41, %c0_42], %75 {strides = array<i32>} : memref<4x8x16xf32, #tpu.memory_space<vmem>>, vector<1x8x16xf32>,
    %c3_43 = arith.constant 3 : index
    %c0_44 = arith.constant 0 : index
    %c0_45 = arith.constant 0 : index
    %76 = vector.load %arg4[%c3_43, %c0_44, %c0_45] : memref<4x8x16xf32, #tpu.memory_space<vmem>>, vector<1x8x16xf32>
    %77 = vector.shape_cast %76 : vector<1x8x16xf32> to vector<8x16xf32>
    %78 = vector.shape_cast %67 : vector<8x16xf32> to vector<1x8x16xf32>
    tpu.vector_store %arg4[%c3_43, %c0_44, %c0_45], %78 {strides = array<i32>} : memref<4x8x16xf32, #tpu.memory_space<vmem>>, vector<1x8x16xf32>,
    %c3_46 = arith.constant 3 : index
    %c0_47 = arith.constant 0 : index
    %c0_48 = arith.constant 0 : index
    %79 = vector.load %arg5[%c3_46, %c0_47, %c0_48] : memref<4x8x1xf32, #tpu.memory_space<vmem>>, vector<1x8x1xf32>
    %80 = vector.shape_cast %79 : vector<1x8x1xf32> to vector<8x1xf32>
    %81 = vector.shape_cast %72 : vector<8x1xf32> to vector<1x8x1xf32>
    tpu.vector_store %arg5[%c3_46, %c0_47, %c0_48], %81 {strides = array<i32>} : memref<4x8x1xf32, #tpu.memory_space<vmem>>, vector<1x8x1xf32>,
    return
  }
}

</mosaic_0001>

<llo_original>
// kernel: tpu_custom_call.1
$region0: #{tpu_custom_call.1}
  #allocation0 [shape = 'u32[]', space=smem, size = 0x4, offset = 0x4, fixed_abs, tag = 'smem constant byte address 0x4 - core index']
  #allocation1 [shape = 'u32[144,128]{1,0:T(1,128)}', space=vmem, size = 0x12000, scoped, tag = 'internal scratch']
  %s0 = inlined_call_operand.hbm [shape: f32[8,16], index: 0, kind: input, shape index: {}]
  %s1 = inlined_call_operand.hbm [shape: f32[16,48], index: 1, kind: input, shape index: {}]
  %s2 = inlined_call_operand.vmem [shape: f32[1,48], index: 2, kind: input, shape index: {}]
  %s3 = inlined_call_operand.hbm [shape: f32[4,8,16], index: 3, kind: output, shape index: {0}]
  %s4 = inlined_call_operand.hbm [shape: f32[4,8,16], index: 4, kind: output, shape index: {1}]
  %s5 = inlined_call_operand.vmem [shape: f32[4,8,1], index: 5, kind: output, shape index: {2}]
  %6 = xla_tuple %s3, %s4, %s5
  %s7 = sld [smem:[#allocation0]]
  $region46: #{tpu_custom_call.1} parent=0
    _
  %s9 = ssub.s32 1, %s7
  %s10 = scalar_select 0, %s9, %s7
  $region1: #{tpu_custom_call.1} parent=0
    #allocation2 [shape = 'u8[4096]{0}', space=vmem, size = 0x1000, scoped, tag = 'input window, operand 0, single buffered']
    #allocation3 [shape = 's32[1]{0}', space=sflag, size = 0x4, scoped, tag = 'scoped memory for tpu_custom_call.1']
    #allocation4 [shape = 's32[1]{0}', space=sflag, size = 0x4, scoped, tag = 'scoped memory for tpu_custom_call.1']
    #allocation5 [shape = 'u8[8192]{0}', space=vmem, size = 0x2000, scoped, tag = 'input window, operand 1, single buffered']
    #allocation6 [shape = 's32[1]{0}', space=sflag, size = 0x4, scoped, tag = 'scoped memory for tpu_custom_call.1']
    #allocation7 [shape = 'u8[16384]{0}', space=vmem, size = 0x4000, scoped, tag = 'output window, operand 0, single buffered']
    #allocation8 [shape = 'u8[16384]{0}', space=vmem, size = 0x4000, scoped, tag = 'output window, operand 1, single buffered']
    #allocation9 [shape = 's32[1]{0}', space=sflag, size = 0x4, scoped, tag = 'scoped memory for tpu_custom_call.1']
    %11 = vsyncpa [#allocation3], 0
    %12 = vsyncpa [#allocation6], 0
    %13 = vsyncpa [#allocation4], 0
    %14 = vsyncpa [#allocation9], 0
    // Predicated region
    $region2: #{tpu_custom_call.1} parent=1 // pred_check
      _
    $region3: #{tpu_custom_call.1} parent=1 // pred_check_branch
      %16 = sbr.rel (0) target = $region5
    $region4: #{tpu_custom_call.1} parent=1 // pred_region
      %s18 = ssub.s32 128, 128
      %19 = vsyncadd [#allocation3], %s18
      %s21 = sshll.u32 [#allocation2], 4
      %s22 = int_to_ptr.vmem [resolvable:$true] %s21
      %24 = dma.hbm_to_vmem [thread:$0]  %s0, 128, %s22, [#allocation3]
    $region5: #{tpu_custom_call.1} parent=1 // pred_fallthru
      _
    // Predicated region
    $region6: #{tpu_custom_call.1} parent=1 // pred_check
      _
    $region7: #{tpu_custom_call.1} parent=1 // pred_check_branch
      %26 = sbr.rel (0) target = $region9
    $region8: #{tpu_custom_call.1} parent=1 // pred_region
      %s28 = ssub.s32 256, 256
      %29 = vsyncadd [#allocation6], %s28
      %s30 = sshll.u32 [#allocation5], 4
      %s31 = int_to_ptr.vmem [resolvable:$true] %s30
      %36 = dma.hbm_to_vmem [thread:$0]  %s1, 256, %s31, [#allocation6], 128, 128, 8
    $region9: #{tpu_custom_call.1} parent=1 // pred_fallthru
      _
    // Predicated region
    $region10: #{tpu_custom_call.1} parent=1 // pred_check
      _
    $region11: #{tpu_custom_call.1} parent=1 // pred_check_branch
      %38 = sbr.rel (0) target = $region13
    $region12: #{tpu_custom_call.1} parent=1 // pred_region
      _
    $region13: #{tpu_custom_call.1} parent=1 // pred_fallthru
      _
    // Predicated region
    $region14: #{tpu_custom_call.1} parent=1 // pred_check
      _
    $region15: #{tpu_custom_call.1} parent=1 // pred_check_branch
      %40 = sbr.rel (0) target = $region17
    $region16: #{tpu_custom_call.1} parent=1 // pred_region
      %41 = dma.done [#allocation3], 128
    $region17: #{tpu_custom_call.1} parent=1 // pred_fallthru
      _
    // Predicated region
    $region18: #{tpu_custom_call.1} parent=1 // pred_check
      _
    $region19: #{tpu_custom_call.1} parent=1 // pred_check_branch
      %43 = sbr.rel (0) target = $region21
    $region20: #{tpu_custom_call.1} parent=1 // pred_region
      %44 = dma.done [#allocation6], 256
    $region21: #{tpu_custom_call.1} parent=1 // pred_fallthru
      _
    %v45 = vld [vmem:[#allocation5] sm:$0xff]
    %v46 = vld [vmem:[#allocation5 + $0x8] sm:$0xff]
    %v47 = vld [vmem:[%s2] sm:$0x1]
    %v48 = vld [vmem:[#allocation2] sm:$0xff]
    %v50 = vlaneseq
    %v51 = vshrl.u32 %v50, 7
    %v52 = vsub.s32 0, %v51
    %v53 = vrot.slane %v47, %v52
    %vm55 = vcmask 130048
    %v57 = vsel %vm55, %v48, 0
    %59 = vmatprep.subr.mxu0 0.0
    %60 = vmatpush1.msra.mxu0 0.0
    %61 = vmatprep.subr.mxu0 0.0
    %62 = vmatpush1.msra.mxu0 0.0
    %63 = vmatprep.subr.mxu0 0.0
    %64 = vmatpush1.msra.mxu0 0.0
    %65 = vmatprep.subr.mxu0 0.0
    %66 = vmatpush1.msra.mxu0 0.0
    %67 = vmatprep.subr.mxu0 0.0
    %68 = vmatpush1.msra.mxu0 0.0
    %69 = vmatprep.subr.mxu0 0.0
    %70 = vmatpush1.msra.mxu0 0.0
    %71 = vmatprep.subr.mxu0 0.0
    %72 = vmatpush1.msra.mxu0 0.0
    %73 = vmatprep.subr.mxu0 0.0
    %74 = vmatpush1.msra.mxu0 0.0
    %75 = vmatprep.subr.mxu0 0.0
    %76 = vmatpush1.msra.mxu0 0.0
    %77 = vmatprep.subr.mxu0 0.0
    %78 = vmatpush1.msra.mxu0 0.0
    %79 = vmatprep.subr.mxu0 0.0
    %80 = vmatpush1.msra.mxu0 0.0
    %81 = vmatprep.subr.mxu0 0.0
    %82 = vmatpush1.msra.mxu0 0.0
    %83 = vmatprep.subr.mxu0 0.0
    %84 = vmatpush1.msra.mxu0 0.0
    %85 = vmatprep.subr.mxu0 0.0
    %86 = vmatpush1.msra.mxu0 0.0
    %87 = vmatprep.subr.mxu0 0.0
    %88 = vmatpush1.msra.mxu0 %v46
    %89 = vmatprep.subr.mxu0 0.0
    %90 = vmatpush1.msra.mxu0 %v45
    %91 = vmatprep.subr.mxu0 0.0
    %92 = vmatpush2.msra.mxu0 0.0
    %93 = vmatprep.subr.mxu0 0.0
    %94 = vmatpush2.msra.mxu0 0.0
    %95 = vmatprep.subr.mxu0 0.0
    %96 = vmatpush2.msra.mxu0 0.0
    %97 = vmatprep.subr.mxu0 0.0
    %98 = vmatpush2.msra.mxu0 0.0
    %99 = vmatprep.subr.mxu0 0.0
    %100 = vmatpush2.msra.mxu0 0.0
    %101 = vmatprep.subr.mxu0 0.0
    %102 = vmatpush2.msra.mxu0 0.0
    %103 = vmatprep.subr.mxu0 0.0
    %104 = vmatpush2.msra.mxu0 0.0
    %105 = vmatprep.subr.mxu0 0.0
    %106 = vmatpush2.msra.mxu0 0.0
    %107 = vmatprep.subr.mxu0 0.0
    %108 = vmatpush2.msra.mxu0 0.0
    %109 = vmatprep.subr.mxu0 0.0
    %110 = vmatpush2.msra.mxu0 0.0
    %111 = vmatprep.subr.mxu0 0.0
    %112 = vmatpush2.msra.mxu0 0.0
    %113 = vmatprep.subr.mxu0 0.0
    %114 = vmatpush2.msra.mxu0 0.0
    %115 = vmatprep.subr.mxu0 0.0
    %116 = vmatpush2.msra.mxu0 0.0
    %117 = vmatprep.subr.mxu0 0.0
    %118 = vmatpush2.msra.mxu0 0.0
    %119 = vmatprep.subr.mxu0 0.0
    %120 = vmatpush2.msra.mxu0 0.0
    %121 = vmatprep.subr.mxu0 0.0
    %122 = vmatpush2.msra.mxu0 0.0
    %123 = vmatprep.mubr.f32.mxu0 0.0
    %124 = vmatmul.mubr.f32.gmra.mxu0 %v57
    %v125 = vpop.f32.mrf.mxu0
    %v126 = vadd.f32 %v53, %v125
    %v127 = vpop.f32.mrf.mxu0
    %128 = vdwg.mxu0
    %v129 = vmul.f32 %v126, %v126
    %131 = vrot.lane.b32.xlu0 %v129, 112
    %v132 = vpop.permute.xlu0 %131
    %v134 = vsel %vm55, %v132, 0.0
    %135 = vadd.xlane.f32.xlu0 %v134
    %v136 = vpop.xlane.xlu0 %135
    %v137 = vmul.f32 %v136, 0.5
    %138 = vst.msk [vmem:[#allocation7] sm:$0xff] %vm55, %v48
    %140 = vrot.lane.b32.xlu0 %v126, 96
    %v141 = vpop.permute.xlu0 %140
    %143 = vst.msk [vmem:[#allocation8] sm:$0xff] %vm55, %v141
    %vm144 = vcmask 7168
    %145 = vst.msk [vmem:[%s5] sm:$0xff] %vm144, %v137
    %v146 = vsel %vm55, %v126, 0
    %148 = vmatprep.subr.mxu0 0.0
    %149 = vmatpush1.msra.mxu0 0.0
    %150 = vmatprep.subr.mxu0 0.0
    %151 = vmatpush1.msra.mxu0 0.0
    %152 = vmatprep.subr.mxu0 0.0
    %153 = vmatpush1.msra.mxu0 0.0
    %154 = vmatprep.subr.mxu0 0.0
    %155 = vmatpush1.msra.mxu0 0.0
    %156 = vmatprep.subr.mxu0 0.0
    %157 = vmatpush1.msra.mxu0 0.0
    %158 = vmatprep.subr.mxu0 0.0
    %159 = vmatpush1.msra.mxu0 0.0
    %160 = vmatprep.subr.mxu0 0.0
    %161 = vmatpush1.msra.mxu0 0.0
    %162 = vmatprep.subr.mxu0 0.0
    %163 = vmatpush1.msra.mxu0 0.0
    %164 = vmatprep.subr.mxu0 0.0
    %165 = vmatpush1.msra.mxu0 0.0
    %166 = vmatprep.subr.mxu0 0.0
    %167 = vmatpush1.msra.mxu0 0.0
    %168 = vmatprep.subr.mxu0 0.0
    %169 = vmatpush1.msra.mxu0 0.0
    %170 = vmatprep.subr.mxu0 0.0
    %171 = vmatpush1.msra.mxu0 0.0
    %172 = vmatprep.subr.mxu0 0.0
    %173 = vmatpush1.msra.mxu0 0.0
    %174 = vmatprep.subr.mxu0 0.0
    %175 = vmatpush1.msra.mxu0 0.0
    %176 = vmatprep.subr.mxu0 0.0
    %177 = vmatpush1.msra.mxu0 %v46
    %178 = vmatprep.subr.mxu0 0.0
    %179 = vmatpush1.msra.mxu0 %v45
    %180 = vmatprep.subr.mxu0 0.0
    %181 = vmatpush2.msra.mxu0 0.0
    %182 = vmatprep.subr.mxu0 0.0
    %183 = vmatpush2.msra.mxu0 0.0
    %184 = vmatprep.subr.mxu0 0.0
    %185 = vmatpush2.msra.mxu0 0.0
    %186 = vmatprep.subr.mxu0 0.0
    %187 = vmatpush2.msra.mxu0 0.0
    %188 = vmatprep.subr.mxu0 0.0
    %189 = vmatpush2.msra.mxu0 0.0
    %190 = vmatprep.subr.mxu0 0.0
    %191 = vmatpush2.msra.mxu0 0.0
    %192 = vmatprep.subr.mxu0 0.0
    %193 = vmatpush2.msra.mxu0 0.0
    %194 = vmatprep.subr.mxu0 0.0
    %195 = vmatpush2.msra.mxu0 0.0
    %196 = vmatprep.subr.mxu0 0.0
    %197 = vmatpush2.msra.mxu0 0.0
    %198 = vmatprep.subr.mxu0 0.0
    %199 = vmatpush2.msra.mxu0 0.0
    %200 = vmatprep.subr.mxu0 0.0
    %201 = vmatpush2.msra.mxu0 0.0
    %202 = vmatprep.subr.mxu0 0.0
    %203 = vmatpush2.msra.mxu0 0.0
    %204 = vmatprep.subr.mxu0 0.0
    %205 = vmatpush2.msra.mxu0 0.0
    %206 = vmatprep.subr.mxu0 0.0
    %207 = vmatpush2.msra.mxu0 0.0
    %208 = vmatprep.subr.mxu0 0.0
    %209 = vmatpush2.msra.mxu0 0.0
    %210 = vmatprep.subr.mxu0 0.0
    %211 = vmatpush2.msra.mxu0 0.0
    %212 = vmatprep.mubr.f32.mxu0 0.0
    %213 = vmatmul.mubr.f32.gmra.mxu0 %v146
    %v214 = vpop.f32.mrf.mxu0
    %v215 = vadd.f32 %v53, %v214
    %v216 = vpop.f32.mrf.mxu0
    %217 = vdwg.mxu0
    %v218 = vmul.f32 %v215, %v215
    %220 = vrot.lane.b32.xlu0 %v218, 112
    %v221 = vpop.permute.xlu0 %220
    %v223 = vsel %vm55, %v221, 0.0
    %224 = vadd.xlane.f32.xlu0 %v223
    %v225 = vpop.xlane.xlu0 %224
    %v226 = vmul.f32 %v225, 0.5
    %s227 = scalar_lea.vmem [#allocation7], 8
    %228 = vst.msk [vmem:[%s227] sm:$0xff] %vm55, %v126
    %230 = vrot.lane.b32.xlu0 %v215, 96
    %v231 = vpop.permute.xlu0 %230
    %s233 = scalar_lea.vmem [#allocation8], 8
    %234 = vst.msk [vmem:[%s233] sm:$0xff] %vm55, %v231
    %s235 = scalar_lea.vmem %s5, 8
    %236 = vst.msk [vmem:[%s235] sm:$0xff] %vm144, %v226
    %v237 = vsel %vm55, %v215, 0
    %239 = vmatprep.subr.mxu0 0.0
    %240 = vmatpush1.msra.mxu0 0.0
    %241 = vmatprep.subr.mxu0 0.0
    %242 = vmatpush1.msra.mxu0 0.0
    %243 = vmatprep.subr.mxu0 0.0
    %244 = vmatpush1.msra.mxu0 0.0
    %245 = vmatprep.subr.mxu0 0.0
    %246 = vmatpush1.msra.mxu0 0.0
    %247 = vmatprep.subr.mxu0 0.0
    %248 = vmatpush1.msra.mxu0 0.0
    %249 = vmatprep.subr.mxu0 0.0
    %250 = vmatpush1.msra.mxu0 0.0
    %251 = vmatprep.subr.mxu0 0.0
    %252 = vmatpush1.msra.mxu0 0.0
    %253 = vmatprep.subr.mxu0 0.0
    %254 = vmatpush1.msra.mxu0 0.0
    %255 = vmatprep.subr.mxu0 0.0
    %256 = vmatpush1.msra.mxu0 0.0
    %257 = vmatprep.subr.mxu0 0.0
    %258 = vmatpush1.msra.mxu0 0.0
    %259 = vmatprep.subr.mxu0 0.0
    %260 = vmatpush1.msra.mxu0 0.0
    %261 = vmatprep.subr.mxu0 0.0
    %262 = vmatpush1.msra.mxu0 0.0
    %263 = vmatprep.subr.mxu0 0.0
    %264 = vmatpush1.msra.mxu0 0.0
    %265 = vmatprep.subr.mxu0 0.0
    %266 = vmatpush1.msra.mxu0 0.0
    %267 = vmatprep.subr.mxu0 0.0
    %268 = vmatpush1.msra.mxu0 %v46
    %269 = vmatprep.subr.mxu0 0.0
    %270 = vmatpush1.msra.mxu0 %v45
    %271 = vmatprep.subr.mxu0 0.0
    %272 = vmatpush2.msra.mxu0 0.0
    %273 = vmatprep.subr.mxu0 0.0
    %274 = vmatpush2.msra.mxu0 0.0
    %275 = vmatprep.subr.mxu0 0.0
    %276 = vmatpush2.msra.mxu0 0.0
    %277 = vmatprep.subr.mxu0 0.0
    %278 = vmatpush2.msra.mxu0 0.0
    %279 = vmatprep.subr.mxu0 0.0
    %280 = vmatpush2.msra.mxu0 0.0
    %281 = vmatprep.subr.mxu0 0.0
    %282 = vmatpush2.msra.mxu0 0.0
    %283 = vmatprep.subr.mxu0 0.0
    %284 = vmatpush2.msra.mxu0 0.0
    %285 = vmatprep.subr.mxu0 0.0
    %286 = vmatpush2.msra.mxu0 0.0
    %287 = vmatprep.subr.mxu0 0.0
    %288 = vmatpush2.msra.mxu0 0.0
    %289 = vmatprep.subr.mxu0 0.0
    %290 = vmatpush2.msra.mxu0 0.0
    %291 = vmatprep.subr.mxu0 0.0
    %292 = vmatpush2.msra.mxu0 0.0
    %293 = vmatprep.subr.mxu0 0.0
    %294 = vmatpush2.msra.mxu0 0.0
    %295 = vmatprep.subr.mxu0 0.0
    %296 = vmatpush2.msra.mxu0 0.0
    %297 = vmatprep.subr.mxu0 0.0
    %298 = vmatpush2.msra.mxu0 0.0
    %299 = vmatprep.subr.mxu0 0.0
    %300 = vmatpush2.msra.mxu0 0.0
    %301 = vmatprep.subr.mxu0 0.0
    %302 = vmatpush2.msra.mxu0 0.0
    %303 = vmatprep.mubr.f32.mxu0 0.0
    %304 = vmatmul.mubr.f32.gmra.mxu0 %v237
    %v305 = vpop.f32.mrf.mxu0
    %v306 = vadd.f32 %v53, %v305
    %v307 = vpop.f32.mrf.mxu0
    %308 = vdwg.mxu0
    %v309 = vmul.f32 %v306, %v306
    %311 = vrot.lane.b32.xlu0 %v309, 112
    %v312 = vpop.permute.xlu0 %311
    %v314 = vsel %vm55, %v312, 0.0
    %315 = vadd.xlane.f32.xlu0 %v314
    %v316 = vpop.xlane.xlu0 %315
    %v317 = vmul.f32 %v316, 0.5
    %s318 = scalar_lea.vmem [#allocation7], 16
    %319 = vst.msk [vmem:[%s318] sm:$0xff] %vm55, %v215
    %321 = vrot.lane.b32.xlu0 %v306, 96
    %v322 = vpop.permute.xlu0 %321
    %s324 = scalar_lea.vmem [#allocation8], 16
    %325 = vst.msk [vmem:[%s324] sm:$0xff] %vm55, %v322
    %s326 = scalar_lea.vmem %s5, 16
    %327 = vst.msk [vmem:[%s326] sm:$0xff] %vm144, %v317
    %v328 = vsel %vm55, %v306, 0
    %330 = vmatprep.subr.mxu0 0.0
    %331 = vmatpush1.msra.mxu0 0.0
    %332 = vmatprep.subr.mxu0 0.0
    %333 = vmatpush1.msra.mxu0 0.0
    %334 = vmatprep.subr.mxu0 0.0
    %335 = vmatpush1.msra.mxu0 0.0
    %336 = vmatprep.subr.mxu0 0.0
    %337 = vmatpush1.msra.mxu0 0.0
    %338 = vmatprep.subr.mxu0 0.0
    %339 = vmatpush1.msra.mxu0 0.0
    %340 = vmatprep.subr.mxu0 0.0
    %341 = vmatpush1.msra.mxu0 0.0
    %342 = vmatprep.subr.mxu0 0.0
    %343 = vmatpush1.msra.mxu0 0.0
    %344 = vmatprep.subr.mxu0 0.0
    %345 = vmatpush1.msra.mxu0 0.0
    %346 = vmatprep.subr.mxu0 0.0
    %347 = vmatpush1.msra.mxu0 0.0
    %348 = vmatprep.subr.mxu0 0.0
    %349 = vmatpush1.msra.mxu0 0.0
    %350 = vmatprep.subr.mxu0 0.0
    %351 = vmatpush1.msra.mxu0 0.0
    %352 = vmatprep.subr.mxu0 0.0
    %353 = vmatpush1.msra.mxu0 0.0
    %354 = vmatprep.subr.mxu0 0.0
    %355 = vmatpush1.msra.mxu0 0.0
    %356 = vmatprep.subr.mxu0 0.0
    %357 = vmatpush1.msra.mxu0 0.0
    %358 = vmatprep.subr.mxu0 0.0
    %359 = vmatpush1.msra.mxu0 %v46
    %360 = vmatprep.subr.mxu0 0.0
    %361 = vmatpush1.msra.mxu0 %v45
    %362 = vmatprep.subr.mxu0 0.0
    %363 = vmatpush2.msra.mxu0 0.0
    %364 = vmatprep.subr.mxu0 0.0
    %365 = vmatpush2.msra.mxu0 0.0
    %366 = vmatprep.subr.mxu0 0.0
    %367 = vmatpush2.msra.mxu0 0.0
    %368 = vmatprep.subr.mxu0 0.0
    %369 = vmatpush2.msra.mxu0 0.0
    %370 = vmatprep.subr.mxu0 0.0
    %371 = vmatpush2.msra.mxu0 0.0
    %372 = vmatprep.subr.mxu0 0.0
    %373 = vmatpush2.msra.mxu0 0.0
    %374 = vmatprep.subr.mxu0 0.0
    %375 = vmatpush2.msra.mxu0 0.0
    %376 = vmatprep.subr.mxu0 0.0
    %377 = vmatpush2.msra.mxu0 0.0
    %378 = vmatprep.subr.mxu0 0.0
    %379 = vmatpush2.msra.mxu0 0.0
    %380 = vmatprep.subr.mxu0 0.0
    %381 = vmatpush2.msra.mxu0 0.0
    %382 = vmatprep.subr.mxu0 0.0
    %383 = vmatpush2.msra.mxu0 0.0
    %384 = vmatprep.subr.mxu0 0.0
    %385 = vmatpush2.msra.mxu0 0.0
    %386 = vmatprep.subr.mxu0 0.0
    %387 = vmatpush2.msra.mxu0 0.0
    %388 = vmatprep.subr.mxu0 0.0
    %389 = vmatpush2.msra.mxu0 0.0
    %390 = vmatprep.subr.mxu0 0.0
    %391 = vmatpush2.msra.mxu0 0.0
    %392 = vmatprep.subr.mxu0 0.0
    %393 = vmatpush2.msra.mxu0 0.0
    %394 = vmatprep.mubr.f32.mxu0 0.0
    %395 = vmatmul.mubr.f32.gmra.mxu0 %v328
    %v396 = vpop.f32.mrf.mxu0
    %v397 = vadd.f32 %v53, %v396
    %v398 = vpop.f32.mrf.mxu0
    %399 = vdwg.mxu0
    %v400 = vmul.f32 %v397, %v397
    %402 = vrot.lane.b32.xlu0 %v400, 112
    %v403 = vpop.permute.xlu0 %402
    %v405 = vsel %vm55, %v403, 0.0
    %406 = vadd.xlane.f32.xlu0 %v405
    %v407 = vpop.xlane.xlu0 %406
    %v408 = vmul.f32 %v407, 0.5
    %s409 = scalar_lea.vmem [#allocation7], 24
    %410 = vst.msk [vmem:[%s409] sm:$0xff] %vm55, %v306
    %412 = vrot.lane.b32.xlu0 %v397, 96
    %v413 = vpop.permute.xlu0 %412
    %s415 = scalar_lea.vmem [#allocation8], 24
    %416 = vst.msk [vmem:[%s415] sm:$0xff] %vm55, %v413
    %s417 = scalar_lea.vmem %s5, 24
    %418 = vst.msk [vmem:[%s417] sm:$0xff] %vm144, %v408
    // Predicated region
    $region22: #{tpu_custom_call.1} parent=1 // pred_check
      _
    $region23: #{tpu_custom_call.1} parent=1 // pred_check_branch
      %420 = sbr.rel (0) target = $region25
    $region24: #{tpu_custom_call.1} parent=1 // pred_region
      %s422 = ssub.s32 512, 512
      %423 = vsyncadd [#allocation4], %s422
      %s424 = sshll.u32 [#allocation7], 4
      %s425 = int_to_ptr.vmem [resolvable:$true] %s424
      %430 = dma.vmem_to_hbm [thread:$0]  %s425, 512, %s3, [#allocation4], 128, 128, 8
    $region25: #{tpu_custom_call.1} parent=1 // pred_fallthru
      _
    // Predicated region
    $region26: #{tpu_custom_call.1} parent=1 // pred_check
      _
    $region27: #{tpu_custom_call.1} parent=1 // pred_check_branch
      %432 = sbr.rel (0) target = $region29
    $region28: #{tpu_custom_call.1} parent=1 // pred_region
      %s434 = ssub.s32 512, 512
      %435 = vsyncadd [#allocation9], %s434
      %s436 = sshll.u32 [#allocation8], 4
      %s437 = int_to_ptr.vmem [resolvable:$true] %s436
      %442 = dma.vmem_to_hbm [thread:$0]  %s437, 512, %s4, [#allocation9], 128, 128, 8
    $region29: #{tpu_custom_call.1} parent=1 // pred_fallthru
      _
    // Predicated region
    $region30: #{tpu_custom_call.1} parent=1 // pred_check
      _
    $region31: #{tpu_custom_call.1} parent=1 // pred_check_branch
      %444 = sbr.rel (0) target = $region33
    $region32: #{tpu_custom_call.1} parent=1 // pred_region
      _
    $region33: #{tpu_custom_call.1} parent=1 // pred_fallthru
      _
    // Predicated region
    $region34: #{tpu_custom_call.1} parent=1 // pred_check
      _
    $region35: #{tpu_custom_call.1} parent=1 // pred_check_branch
      %446 = sbr.rel (0) target = $region37
    $region36: #{tpu_custom_call.1} parent=1 // pred_region
      %447 = dma.done [#allocation4], 512
    $region37: #{tpu_custom_call.1} parent=1 // pred_fallthru
      _
    // Predicated region
    $region38: #{tpu_custom_call.1} parent=1 // pred_check
      _
    $region39: #{tpu_custom_call.1} parent=1 // pred_check_branch
      %449 = sbr.rel (0) target = $region41
    $region40: #{tpu_custom_call.1} parent=1 // pred_region
      %450 = dma.done [#allocation9], 512
    $region41: #{tpu_custom_call.1} parent=1 // pred_fallthru
      _
    // Predicated region
    $region42: #{tpu_custom_call.1} parent=1 // pred_check
      _
    $region43: #{tpu_custom_call.1} parent=1 // pred_check_branch
      %452 = sbr.rel (0) target = $region45
    $region44: #{tpu_custom_call.1} parent=1 // pred_region
      _
    $region45: #{tpu_custom_call.1} parent=1 // pred_fallthru
      _
    %453 = vsyncpa [#allocation3], 1
    %454 = vsyncpa [#allocation6], 1
    %455 = vsyncpa [#allocation4], 1
    %456 = vsyncpa [#allocation9], 1

</llo_original>
